<compile_context>
chip_gen: v7x
topology: tpu7x:2x2x1
jax: 0.10.0
libtpu: 0.0.40
codegen_flags: <defaults>
</compile_context>

<pallas_src>
import functools

import jax
import jax.numpy as jnp
from jax.experimental import pallas as pl
from jax.experimental.pallas import tpu as pltpu


def _ls_ce_kernel(logits_ref, tgt_ref, out_ref, m_scr, l_scr, w_scr, *,
                  confidence, smooth_over_c, block_c, num_classes, ragged_c):
    c = pl.program_id(1)

    @pl.when(c == 0)
    def _init():
        m_scr[...] = jnp.full_like(m_scr, -jnp.inf)
        l_scr[...] = jnp.zeros_like(l_scr)
        w_scr[...] = jnp.zeros_like(w_scr)

    x = logits_ref[...].astype(jnp.float32)                 # (TB, TC) f32 in-register
    local_ids = jax.lax.broadcasted_iota(jnp.int32, x.shape, 1)

    if ragged_c:
        # Only needed when C % block_c != 0 (static): mask block padding.
        valid = local_ids < (num_classes - c * block_c)
        x_for_max = jnp.where(valid, x, -jnp.inf)
    else:
        x_for_max = x

    # Online (flash-style) logsumexp across class tiles.
    m_prev = m_scr[...]
    m_new = jnp.maximum(m_prev, jnp.max(x_for_max, axis=-1, keepdims=True))
    e = jnp.exp(x - m_new)
    if ragged_c:
        e = jnp.where(valid, e, 0.0)
    l_scr[...] = (l_scr[...] * jnp.exp(m_prev - m_new)
                  + jnp.sum(e, axis=-1, keepdims=True))
    m_scr[...] = m_new

    # Fused weighted accumulator:
    #   w += sum_j x[j] * (smoothing/C + confidence * [j == target])
    # (compare plain 0..TC-1 iota against per-row shifted target: (TB,1) op)
    match = local_ids == (tgt_ref[...] - c * block_c)
    w = jnp.where(match, confidence, 0.0)
    if ragged_c:
        w = jnp.where(valid, w + smooth_over_c, 0.0)
        contrib = jnp.where(valid, x * w, 0.0)              # guard NaN/Inf padding
    else:
        contrib = x * (w + smooth_over_c)
    w_scr[...] += jnp.sum(contrib, axis=-1, keepdims=True)

    @pl.when(c == pl.num_programs(1) - 1)
    def _finalize():
        logz = m_scr[...] + jnp.log(l_scr[...])             # (TB, 1)
        out_ref[...] = logz - w_scr[...]


def _round_up(x, m):
    return ((x + m - 1) // m) * m


def _batch_tile(B, block_b):
    """Multiple of 8; capped at ~B/2 so the 'parallel' axis has >= 2 blocks
    (lets v7x shard across both TensorCores; harmless on 1-TC chips)."""
    tb = min(block_b, _round_up(B, 8))
    if B > 8:
        tb = min(tb, _round_up(pl.cdiv(B, 2), 8))
    return max(8, (tb // 8) * 8)


def _class_tile(C, block_c):
    """Multiple of 128 (or the full dim when C <= 128); ragged tail is masked
    in-kernel, so no full-vocab fallback blocks ever appear."""
    if C <= 128:
        return C
    tc = min(block_c, _round_up(C, 128))
    return max(128, (tc // 128) * 128)


def label_smoothing_cross_entropy(inputs, targets, smoothing=0.1, *,
                                  block_b=256, block_c=2048):
    """inputs: (B, C) float logits (f32 or bf16); targets: (B,) int class ids."""
    B, C = inputs.shape
    tb = _batch_tile(B, block_b)          # sublane axis tile
    tc = _class_tile(C, block_c)          # lane axis tile
    grid = (pl.cdiv(B, tb), pl.cdiv(C, tc))
    ragged_c = (C % tc) != 0

    tgt = targets.astype(jnp.int32).reshape(B, 1)

    kernel = functools.partial(
        _ls_ce_kernel,
        confidence=float(1.0 - smoothing),
        smooth_over_c=float(smoothing) / float(C),   # divide by the TRUE C
        block_c=tc,
        num_classes=C,
        ragged_c=ragged_c,
    )

    itemsize = inputs.dtype.itemsize
    # Budget: double-buffered logits tile + ~6 tile-sized f32 temporaries.
    vmem_limit = int(min(48 * 2**20,
                         max(16 * 2**20,
                             2 * tb * tc * itemsize + 6 * tb * tc * 4 + (1 << 20))))
    cost = pl.CostEstimate(
        flops=8 * B * C,
        transcendentals=B * C,
        bytes_accessed=B * C * itemsize + 2 * B * 4 + B * 4,
    )

    per_row = pl.pallas_call(
        kernel,
        out_shape=jax.ShapeDtypeStruct((B, 1), jnp.float32),
        grid_spec=pltpu.PrefetchScalarGridSpec(
            num_scalar_prefetch=0,
            grid=grid,
            in_specs=[
                pl.BlockSpec((tb, tc), lambda i, c: (i, c)),   # logits tile
                pl.BlockSpec((tb, 1), lambda i, c: (i, 0)),    # targets column
            ],
            out_specs=pl.BlockSpec((tb, 1), lambda i, c: (i, 0)),
            scratch_shapes=[pltpu.VMEM((tb, 1), jnp.float32)] * 3,  # m, l, w
        ),
        compiler_params=pltpu.CompilerParams(
            dimension_semantics=("parallel", "arbitrary"),
            vmem_limit_bytes=vmem_limit),
        cost_estimate=cost,
    )(inputs, tgt)

    return jnp.mean(per_row)


def _reference(inputs, targets, smoothing):
    logp = jax.nn.log_softmax(inputs.astype(jnp.float32), axis=-1)
    nll = -jnp.take_along_axis(logp, targets[:, None], axis=-1)[:, 0]
    smooth = -jnp.mean(logp, axis=-1)
    return jnp.mean((1.0 - smoothing) * nll + smoothing * smooth)


if __name__ == "__main__":
    key = jax.random.PRNGKey(0)
    k1, k2, k3, k4 = jax.random.split(key, 4)
    smoothing = 0.1

    # 1) f32, multi-block grid with evenly divisible tiles.
    B, C = 16, 256
    logits = jax.random.normal(k1, (B, C), dtype=jnp.float32)
    targets = jax.random.randint(k2, (B,), 0, C, dtype=jnp.int32)
    out = jax.block_until_ready(
        label_smoothing_cross_entropy(logits, targets, smoothing,
                                      block_b=8, block_c=128))
    ref = jax.block_until_ready(_reference(logits, targets, smoothing))
    assert jnp.allclose(out, ref, atol=1e-5, rtol=1e-5), (out, ref)

    # 2) Ragged batch (B % 8 != 0) and ragged vocab (C % 128 != 0):
    #    exercises the cdiv grid + in-kernel class-padding masks.
    B2, C2 = 12, 200
    logits2 = jax.random.normal(k3, (B2, C2), dtype=jnp.float32)
    targets2 = jax.random.randint(k4, (B2,), 0, C2, dtype=jnp.int32)
    out2 = jax.block_until_ready(
        label_smoothing_cross_entropy(logits2, targets2, smoothing,
                                      block_b=8, block_c=128))
    ref2 = jax.block_until_ready(_reference(logits2, targets2, smoothing))
    assert jnp.allclose(out2, ref2, atol=1e-5, rtol=1e-5), (out2, ref2)

    # 3) bf16 logits stay bf16 in HBM (halved read bytes); cast in-register.
    logits_bf16 = logits.astype(jnp.bfloat16)
    out_bf = jax.block_until_ready(
        label_smoothing_cross_entropy(logits_bf16, targets, smoothing,
                                      block_b=16, block_c=128))
    ref_bf = jax.block_until_ready(_reference(logits_bf16, targets, smoothing))
    assert jnp.allclose(out_bf, ref_bf, atol=1e-4, rtol=1e-4), (out_bf, ref_bf)

    print("KERNEL_OK")
</pallas_src>

<mosaic_0001>
module attributes {stable_mosaic.version = 11 : i64} {
  func.func @_ls_ce_kernel(%arg0: i32, %arg1: i32, %arg2: memref<8x128xf32, #tpu.memory_space<vmem>>, %arg3: memref<8x1xi32, #tpu.memory_space<vmem>>, %arg4: memref<8x1xf32, #tpu.memory_space<vmem>>, %arg5: memref<8x1xf32, #tpu.memory_space<vmem>>, %arg6: memref<8x1xf32, #tpu.memory_space<vmem>>, %arg7: memref<8x1xf32, #tpu.memory_space<vmem>>) attributes {dimension_semantics = [#tpu.dimension_semantics<parallel>, #tpu.dimension_semantics<arbitrary>], iteration_bounds = array<i64: 2, 2>, scalar_prefetch = 0 : i64, scratch_operands = 3 : i64, tpu.core_type = #tpu.core_type<tc>, window_params = [{transform_indices = @transform_0, window_bounds = array<i64: 8, 128>}, {transform_indices = @transform_1, window_bounds = array<i64: 8, 1>}, {transform_indices = @transform_2, window_bounds = array<i64: 8, 1>}]} {
    %c0_i32 = arith.constant 0 : i32
    %0 = arith.cmpi eq, %arg1, %c0_i32 : i32
    %1 = arith.extui %0 : i1 to i32
    %c0_i32_0 = arith.constant 0 : i32
    %2 = arith.cmpi ne, %1, %c0_i32_0 : i32
    scf.if %2 {
      %cst_22 = arith.constant 0xFF800000 : f32
      %41 = vector.broadcast %cst_22 : f32 to vector<8x1xf32>
      %c0_23 = arith.constant 0 : index
      %c0_24 = arith.constant 0 : index
      %42 = vector.load %arg5[%c0_23, %c0_24] : memref<8x1xf32, #tpu.memory_space<vmem>>, vector<8x1xf32>
      tpu.vector_store %arg5[%c0_23, %c0_24], %41 {strides = array<i32>} : memref<8x1xf32, #tpu.memory_space<vmem>>, vector<8x1xf32>,
      %cst_25 = arith.constant 0.000000e+00 : f32
      %43 = vector.broadcast %cst_25 : f32 to vector<8x1xf32>
      %c0_26 = arith.constant 0 : index
      %c0_27 = arith.constant 0 : index
      %44 = vector.load %arg6[%c0_26, %c0_27] : memref<8x1xf32, #tpu.memory_space<vmem>>, vector<8x1xf32>
      tpu.vector_store %arg6[%c0_26, %c0_27], %43 {strides = array<i32>} : memref<8x1xf32, #tpu.memory_space<vmem>>, vector<8x1xf32>,
      %cst_28 = arith.constant 0.000000e+00 : f32
      %45 = vector.broadcast %cst_28 : f32 to vector<8x1xf32>
      %c0_29 = arith.constant 0 : index
      %c0_30 = arith.constant 0 : index
      %46 = vector.load %arg7[%c0_29, %c0_30] : memref<8x1xf32, #tpu.memory_space<vmem>>, vector<8x1xf32>
      tpu.vector_store %arg7[%c0_29, %c0_30], %45 {strides = array<i32>} : memref<8x1xf32, #tpu.memory_space<vmem>>, vector<8x1xf32>,
    } else {
    }
    %c0 = arith.constant 0 : index
    %c0_1 = arith.constant 0 : index
    %3 = vector.load %arg2[%c0, %c0_1] : memref<8x128xf32, #tpu.memory_space<vmem>>, vector<8x128xf32>
    %4 = tpu.iota {dimensions = array<i32: 1>} : vector<8x128xi32>
    %c0_2 = arith.constant 0 : index
    %c0_3 = arith.constant 0 : index
    %5 = vector.load %arg5[%c0_2, %c0_3] : memref<8x1xf32, #tpu.memory_space<vmem>>, vector<8x1xf32>
    %cst = arith.constant dense<0xFF800000> : vector<8xf32>
    %6 = vector.multi_reduction <maximumf>, %3, %cst [1] : vector<8x128xf32> to vector<8xf32>
    %7 = vector.shape_cast %6 : vector<8xf32> to vector<8x1xf32>
    %8 = arith.maximumf %5, %7 : vector<8x1xf32>
    %9 = vector.broadcast %8 : vector<8x1xf32> to vector<8x128xf32>
    %10 = arith.subf %3, %9 : vector<8x128xf32>
    %11 = math.exp %10 : vector<8x128xf32>
    %c0_4 = arith.constant 0 : index
    %c0_5 = arith.constant 0 : index
    %12 = vector.load %arg6[%c0_4, %c0_5] : memref<8x1xf32, #tpu.memory_space<vmem>>, vector<8x1xf32>
    %13 = arith.subf %5, %8 : vector<8x1xf32>
    %14 = math.exp %13 : vector<8x1xf32>
    %15 = arith.mulf %12, %14 : vector<8x1xf32>
    %cst_6 = arith.constant dense<0.000000e+00> : vector<8xf32>
    %16 = vector.multi_reduction <add>, %11, %cst_6 [1] : vector<8x128xf32> to vector<8xf32>
    %17 = vector.shape_cast %16 : vector<8xf32> to vector<8x1xf32>
    %18 = arith.addf %15, %17 : vector<8x1xf32>
    %c0_7 = arith.constant 0 : index
    %c0_8 = arith.constant 0 : index
    %19 = vector.load %arg6[%c0_7, %c0_8] : memref<8x1xf32, #tpu.memory_space<vmem>>, vector<8x1xf32>
    tpu.vector_store %arg6[%c0_7, %c0_8], %18 {strides = array<i32>} : memref<8x1xf32, #tpu.memory_space<vmem>>, vector<8x1xf32>,
    %c0_9 = arith.constant 0 : index
    %c0_10 = arith.constant 0 : index
    %20 = vector.load %arg5[%c0_9, %c0_10] : memref<8x1xf32, #tpu.memory_space<vmem>>, vector<8x1xf32>
    tpu.vector_store %arg5[%c0_9, %c0_10], %8 {strides = array<i32>} : memref<8x1xf32, #tpu.memory_space<vmem>>, vector<8x1xf32>,
    %c0_11 = arith.constant 0 : index
    %c0_12 = arith.constant 0 : index
    %21 = vector.load %arg3[%c0_11, %c0_12] : memref<8x1xi32, #tpu.memory_space<vmem>>, vector<8x1xi32>
    %c128_i32 = arith.constant 128 : i32
    %22 = arith.muli %arg1, %c128_i32 : i32
    %23 = vector.broadcast %22 : i32 to vector<8x1xi32>
    %24 = arith.subi %21, %23 : vector<8x1xi32>
    %25 = vector.broadcast %24 : vector<8x1xi32> to vector<8x128xi32>
    %26 = arith.cmpi eq, %4, %25 : vector<8x128xi32>
    %cst_13 = arith.constant 0.899999976 : f32
    %cst_14 = arith.constant 0.000000e+00 : f32
    %27 = vector.broadcast %cst_13 : f32 to vector<8x128xf32>
    %28 = vector.broadcast %cst_14 : f32 to vector<8x128xf32>
    %29 = arith.select %26, %27, %28 : vector<8x128xi1>, vector<8x128xf32>
    %cst_15 = arith.constant 3.906250e-04 : f32
    %30 = vector.broadcast %cst_15 : f32 to vector<8x128xf32>
    %31 = arith.addf %29, %30 : vector<8x128xf32>
    %32 = arith.mulf %3, %31 : vector<8x128xf32>
    %c0_16 = arith.constant 0 : index
    %c0_17 = arith.constant 0 : index
    %33 = vector.load %arg7[%c0_16, %c0_17] : memref<8x1xf32, #tpu.memory_space<vmem>>, vector<8x1xf32>
    %cst_18 = arith.constant dense<0.000000e+00> : vector<8xf32>
    %34 = vector.multi_reduction <add>, %32, %cst_18 [1] : vector<8x128xf32> to vector<8xf32>
    %35 = vector.shape_cast %34 : vector<8xf32> to vector<8x1xf32>
    %36 = arith.addf %33, %35 : vector<8x1xf32>
    %c0_19 = arith.constant 0 : index
    %c0_20 = arith.constant 0 : index
    %37 = vector.load %arg7[%c0_19, %c0_20] : memref<8x1xf32, #tpu.memory_space<vmem>>, vector<8x1xf32>
    tpu.vector_store %arg7[%c0_19, %c0_20], %36 {strides = array<i32>} : memref<8x1xf32, #tpu.memory_space<vmem>>, vector<8x1xf32>,
    %c1_i32 = arith.constant 1 : i32
    %38 = arith.cmpi eq, %arg1, %c1_i32 : i32
    %39 = arith.extui %38 : i1 to i32
    %c0_i32_21 = arith.constant 0 : i32
    %40 = arith.cmpi ne, %39, %c0_i32_21 : i32
    scf.if %40 {
      %c0_22 = arith.constant 0 : index
      %c0_23 = arith.constant 0 : index
      %41 = vector.load %arg5[%c0_22, %c0_23] : memref<8x1xf32, #tpu.memory_space<vmem>>, vector<8x1xf32>
      %c0_24 = arith.constant 0 : index
      %c0_25 = arith.constant 0 : index
      %42 = vector.load %arg6[%c0_24, %c0_25] : memref<8x1xf32, #tpu.memory_space<vmem>>, vector<8x1xf32>
      %43 = math.log %42 : vector<8x1xf32>
      %44 = arith.addf %41, %43 : vector<8x1xf32>
      %c0_26 = arith.constant 0 : index
      %c0_27 = arith.constant 0 : index
      %45 = vector.load %arg7[%c0_26, %c0_27] : memref<8x1xf32, #tpu.memory_space<vmem>>, vector<8x1xf32>
      %46 = arith.subf %44, %45 : vector<8x1xf32>
      %c0_28 = arith.constant 0 : index
      %c0_29 = arith.constant 0 : index
      %47 = vector.load %arg4[%c0_28, %c0_29] : memref<8x1xf32, #tpu.memory_space<vmem>>, vector<8x1xf32>
      tpu.vector_store %arg4[%c0_28, %c0_29], %46 {strides = array<i32>} : memref<8x1xf32, #tpu.memory_space<vmem>>, vector<8x1xf32>,
    } else {
    }
    return
  }
  func.func @transform_0(%arg0: i32, %arg1: i32) -> (i32, i32) {
    %c0_i32 = arith.constant 0 : i32
    return %arg0, %arg1 : i32, i32
  }
  func.func @transform_1(%arg0: i32, %arg1: i32) -> (i32, i32) {
    %c0_i32 = arith.constant 0 : i32
    %c0_i32_0 = arith.constant 0 : i32
    return %arg0, %c0_i32 : i32, i32
  }
  func.func @transform_2(%arg0: i32, %arg1: i32) -> (i32, i32) {
    %c0_i32 = arith.constant 0 : i32
    %c0_i32_0 = arith.constant 0 : i32
    return %arg0, %c0_i32 : i32, i32
  }
}

</mosaic_0001>

<llo_original>
// kernel: tpu_custom_call.1
$region0: #{tpu_custom_call.1}
  #allocation0 [shape = 'u32[]', space=smem, size = 0x4, offset = 0x4, fixed_abs, tag = 'smem constant byte address 0x4 - core index']
  #allocation1 [shape = 'u32[144,128]{1,0:T(1,128)}', space=vmem, size = 0x12000, scoped, tag = 'internal scratch']
  #allocation2 [shape = 'f32[8,1]{1,0:T(8,128)}', space=vmem, size = 0x1000, scoped, tag = 'scratch operand']
  #allocation3 [shape = 'f32[8,1]{1,0:T(8,128)}', space=vmem, size = 0x1000, scoped, tag = 'scratch operand']
  #allocation4 [shape = 'f32[8,1]{1,0:T(8,128)}', space=vmem, size = 0x1000, scoped, tag = 'scratch operand']
  %s0 = inlined_call_operand.hbm [shape: f32[16,256], index: 0, kind: input, shape index: {}]
  %s1 = inlined_call_operand.vmem [shape: s32[16,1], index: 1, kind: input, shape index: {}]
  %s2 = inlined_call_operand.vmem [shape: f32[16,1], index: 2, kind: output, shape index: {}]
  %s3 = sld [smem:[#allocation0]]
  $region53: #{tpu_custom_call.1} parent=0
    _
  %s5 = ssub.s32 1, %s3
  %s6 = scalar_select 0, %s5, %s3
  $region1: #{tpu_custom_call.1} parent=0
    #allocation5 [shape = 'u8[8192]{0}', space=vmem, size = 0x2000, scoped, tag = 'input window, operand 0']
    #allocation6 [shape = 's32[2]{0}', space=sflag, size = 0x8, scoped, tag = 'scoped memory for tpu_custom_call.1']
    %7 = vsyncpa [#allocation6], 0
    %s8 = scalar_lea.sflag [#allocation6], 1
    %9 = vsyncpa %s8, 0
    loop: start=0, step=1, limit=6
    $region2: #{tpu_custom_call.1} parent=1 // loop_pre_header
      _
    $region3: #{tpu_custom_call.1} parent=1 // loop_header
      %s11 = sphi 0, %s15
      %p12 = scmp.ge.s32.totalorder %s11, 6
      %s18 = sphi 0, %s30
      %s19 = sphi 0, %s26
      %s20 = sphi 0, %s18
      %s21 = sphi 0, %s19
      %s22 = sphi 0, %s20
      %s23 = sphi 0, %s21
      %s35 = sphi 0, %s37
      %s38 = sphi 0, %s35
      %s39 = sphi 0, %s38
      %s55 = sphi 0, %s39
      %s61 = sphi 0, %s63
      %s64 = sphi 0, %s61
      %s65 = sphi 0, %s64
      %s81 = sphi 0, %s65
      %s87 = sphi 0, %s89
      %s90 = sphi 0, %s87
      %s91 = sphi 0, %s90
      %s107 = sphi 0, %s91
    $region4: #{tpu_custom_call.1} parent=1 // loop_header_branch
      %14 = sbr.rel (%p12) target = $region8
    $region5: #{tpu_custom_call.1} parent=1 // loop_body
      %s16 = ssub.s32 %s11, 1
      %s17 = ssub.s32 %s11, 2
      %s24 = sadd.s32 1, %s19
      %p25 = scmp.ge.s32.totalorder %s24, 2
      %s26 = scalar_select %p25, 0, %s24
      %s27 = sadd.s32 1, %s18
      %s28 = scalar_select %p25, %s27, %s18
      %p29 = scmp.ge.s32.totalorder %s28, 2
      %s30 = scalar_select %p29, 0, %s28
      %s31 = ssub.s32 %s18, %s30
      %s32 = ssub.s32 %s19, %s26
      %s33 = sor.u32 %s31, %s32
      %p34 = scmp.eq.s32.totalorder %s33, 0
      %s36 = sadd.s32 %s35, 1
      %s37 = scalar_select %p34, %s35, %s36
      %p40 = pneg %p34
      %p41 = scmp.eq.s32.totalorder %s11, 3
      %p42 = por %p40, %p41
      %p43 = scmp.ne.s32.totalorder %s35, %s38
      %p44 = scmp.eq.s32.totalorder %s11, 0
      %p45 = por %p43, %p44
      %p46 = scmp.ne.s32.totalorder %s35, %s38
      %p47 = scmp.eq.s32.totalorder %s16, 3
      %p48 = por %p46, %p47
      %p49 = scmp.ne.s32.totalorder %s38, %s39
      %p50 = scmp.eq.s32.totalorder %s16, 0
      %p51 = por %p49, %p50
      %p52 = scmp.ne.s32.totalorder %s38, %s39
      %p53 = scmp.eq.s32.totalorder %s17, 3
      %p54 = por %p52, %p53
      %p56 = scmp.ne.s32.totalorder %s39, %s55
      %p57 = scmp.eq.s32.totalorder %s17, 0
      %p58 = por %p56, %p57
      %s59 = ssub.s32 %s18, %s30
      %p60 = scmp.eq.s32.totalorder %s59, 0
      %s62 = sadd.s32 %s61, 1
      %s63 = scalar_select %p60, %s61, %s62
      %p66 = pneg %p60
      %p67 = scmp.eq.s32.totalorder %s11, 3
      %p68 = por %p66, %p67
      %p69 = scmp.ne.s32.totalorder %s61, %s64
      %p70 = scmp.eq.s32.totalorder %s11, 0
      %p71 = por %p69, %p70
      %p72 = scmp.ne.s32.totalorder %s61, %s64
      %p73 = scmp.eq.s32.totalorder %s16, 3
      %p74 = por %p72, %p73
      %p75 = scmp.ne.s32.totalorder %s64, %s65
      %p76 = scmp.eq.s32.totalorder %s16, 0
      %p77 = por %p75, %p76
      %p78 = scmp.ne.s32.totalorder %s64, %s65
      %p79 = scmp.eq.s32.totalorder %s17, 3
      %p80 = por %p78, %p79
      %p82 = scmp.ne.s32.totalorder %s65, %s81
      %p83 = scmp.eq.s32.totalorder %s17, 0
      %p84 = por %p82, %p83
      %s85 = ssub.s32 %s18, %s30
      %p86 = scmp.eq.s32.totalorder %s85, 0
      %s88 = sadd.s32 %s87, 1
      %s89 = scalar_select %p86, %s87, %s88
      %p92 = pneg %p86
      %p93 = scmp.eq.s32.totalorder %s11, 3
      %p94 = por %p92, %p93
      %p95 = scmp.ne.s32.totalorder %s87, %s90
      %p96 = scmp.eq.s32.totalorder %s11, 0
      %p97 = por %p95, %p96
      %p98 = scmp.ne.s32.totalorder %s87, %s90
      %p99 = scmp.eq.s32.totalorder %s16, 3
      %p100 = por %p98, %p99
      %p101 = scmp.ne.s32.totalorder %s90, %s91
      %p102 = scmp.eq.s32.totalorder %s16, 0
      %p103 = por %p101, %p102
      %p104 = scmp.ne.s32.totalorder %s90, %s91
      %p105 = scmp.eq.s32.totalorder %s17, 3
      %p106 = por %p104, %p105
      %p108 = scmp.ne.s32.totalorder %s91, %s107
      %p109 = scmp.eq.s32.totalorder %s17, 0
      %p110 = por %p108, %p109
      %p111 = scmp.le.s32.totalorder 1, %s11
      %p112 = scmp.lt.s32.totalorder %s11, 5
      %p113 = pnand %p111, %p112
      %p114 = pneg %p113
      // Predicated region
      $region9: #{tpu_custom_call.1} parent=5 // pred_check
        _
      $region10: #{tpu_custom_call.1} parent=5 // pred_check_branch
        %116 = sbr.rel (%p113) target = $region12
      $region11: #{tpu_custom_call.1} parent=5 // pred_region
        %s117 = ssub.s32 %s11, 1
      $region12: #{tpu_custom_call.1} parent=5 // pred_fallthru
        _
      %p118 = scmp.lt.s32.totalorder %s11, 4
      // Predicated region
      $region13: #{tpu_custom_call.1} parent=5 // pred_check
        %p119 = pneg %p118
      $region14: #{tpu_custom_call.1} parent=5 // pred_check_branch
        %121 = sbr.rel (%p119) target = $region16
      $region15: #{tpu_custom_call.1} parent=5 // pred_region
        // Predicated region
        $region17: #{tpu_custom_call.1} parent=15 // pred_check
          %p122 = pneg %p45
        $region18: #{tpu_custom_call.1} parent=15 // pred_check_branch
          %124 = sbr.rel (%p122) target = $region20
        $region19: #{tpu_custom_call.1} parent=15 // pred_region
          %s125 = sand.u32 %s35, 1
          %s126 = scalar_lea.sflag [#allocation6], %s125
          %s127 = sand.u32 %s35, 1
          %s128 = smul.addr %s127, 8
          %s129 = scalar_lea.vmem [#allocation5], %s128
          %s131 = ssub.s32 128, 128
          %132 = vsyncadd %s126, %s131
          %s133 = smul.addr %s18, 2
          %s134 = sadd.s32 %s19, %s133
          %s135 = smul.addr %s134, 128
          %s136 = scalar_lea.hbm %s0, %s135
          %s138 = sshll.u32 %s129, 4
          %s139 = int_to_ptr.vmem [resolvable:$true] %s138
          %141 = dma.hbm_to_vmem [thread:$0]  %s136, 128, %s139, %s126
        $region20: #{tpu_custom_call.1} parent=15 // pred_fallthru
          _
        // Predicated region
        $region21: #{tpu_custom_call.1} parent=15 // pred_check
          %p142 = pneg %p71
        $region22: #{tpu_custom_call.1} parent=15 // pred_check_branch
          %144 = sbr.rel (%p142) target = $region24
        $region23: #{tpu_custom_call.1} parent=15 // pred_region
          %p145 = scmp.lt.s32.totalorder %s18, 1
          %s146 = scalar_select %p145, %s18, 1
          %s147 = smul.addr %s146, 8
          %s148 = scalar_lea.vmem %s1, %s147
        $region24: #{tpu_custom_call.1} parent=15 // pred_fallthru
          _
      $region16: #{tpu_custom_call.1} parent=5 // pred_fallthru
        _
      %p149 = scmp.le.s32.totalorder 1, %s11
      %p150 = scmp.lt.s32.totalorder %s11, 5
      %p151 = pnand %p149, %p150
      %p152 = pneg %p151
      // Predicated region
      $region25: #{tpu_custom_call.1} parent=5 // pred_check
        _
      $region26: #{tpu_custom_call.1} parent=5 // pred_check_branch
        %154 = sbr.rel (%p151) target = $region28
      $region27: #{tpu_custom_call.1} parent=5 // pred_region
        %s155 = ssub.s32 %s11, 1
        %s156 = sand.u32 %s38, 1
        %s157 = scalar_lea.sflag [#allocation6], %s156
        %s158 = sand.u32 %s38, 1
        %s159 = smul.addr %s158, 8
        %s160 = scalar_lea.vmem [#allocation5], %s159
        // Predicated region
        $region29: #{tpu_custom_call.1} parent=27 // pred_check
          %p161 = pneg %p51
        $region30: #{tpu_custom_call.1} parent=27 // pred_check_branch
          %163 = sbr.rel (%p161) target = $region32
        $region31: #{tpu_custom_call.1} parent=27 // pred_region
          %164 = dma.done %s157, 128
        $region32: #{tpu_custom_call.1} parent=27 // pred_fallthru
          _
        %s165 = sand.u32 %s38, 1
        %s166 = scalar_lea.sflag [#allocation6], %s165
        %s167 = sand.u32 %s38, 1
        %s168 = smul.addr %s167, 8
        %s169 = scalar_lea.vmem [#allocation5], %s168
        %p170 = pneg %p51
        %p171 = pneg %p48
        %p172 = scmp.lt.s32.totalorder %s20, 1
        %s173 = scalar_select %p172, %s20, 1
        %s174 = smul.addr %s173, 8
        %s175 = scalar_lea.vmem %s1, %s174
        %p176 = pneg %p77
        %p177 = pneg %p74
        %p178 = pneg %p103
        %p179 = pneg %p100
        %p180 = scmp.lt.s32.totalorder %s20, 1
        %s181 = scalar_select %p180, %s20, 1
        %s182 = smul.addr %s181, 8
        %s183 = scalar_lea.vmem %s2, %s182
        %p184 = scmp.lt.s32.totalorder %s20, 1
        %s185 = scalar_select %p184, %s20, 1
        %s186 = smul.addr %s185, 8
        %s187 = scalar_lea.vmem %s1, %s186
        %p188 = scmp.lt.s32.totalorder %s20, 1
        %s189 = scalar_select %p188, %s20, 1
        %s190 = smul.addr %s189, 8
        %s191 = scalar_lea.vmem %s2, %s190
        %p192 = scmp.eq.s32.totalorder %s21, 0
        // Predicated region
        $region33: #{tpu_custom_call.1} parent=27 // pred_check
          %p193 = pneg %p192
        $region34: #{tpu_custom_call.1} parent=27 // pred_check_branch
          %195 = sbr.rel (%p193) target = $region36
        $region35: #{tpu_custom_call.1} parent=27 // pred_region
          %vm196 = vcmask 7168
          %197 = vst.msk [vmem:[#allocation2] sm:$0xff] %vm196, -inf
          %198 = vst.msk [vmem:[#allocation3] sm:$0xff] %vm196, 0.0
          %199 = vst.msk [vmem:[#allocation4] sm:$0xff] %vm196, 0.0
        $region36: #{tpu_custom_call.1} parent=27 // pred_fallthru
          _
        %v200 = vld [vmem:[%s160] sm:$0xff]
        %v201 = vlaneseq
        %v202 = vand.u32 %v201, 127
        %v203 = vld [vmem:[#allocation2] sm:$0xff]
        %204 = vmax.xlane.f32.xlu0 %v200
        %v205 = vpop.xlane.xlu0 %204
        %v206 = vmax.f32 %v203, %v205
        %208 = vset.pattern.permute.xlu0 0
        %209 = vperm.xlu0 %208, %v206
        %v210 = vpop.permute.xlu0 %209
        %v212 = vsub.f32 %v200, %v210
        %v213 = vmul.f32 %v212, 1.442695
        %v214 = vpow.pop %v213
        %v215 = vld [vmem:[#allocation3] sm:$0xff]
        %v216 = vsub.f32 %v203, %v206
        %v217 = vmul.f32 %v216, 1.442695
        %v218 = vpow.pop %v217
        %v219 = vmul.f32 %v215, %v218
        %220 = vadd.xlane.f32.xlu0 %v214
        %v221 = vpop.xlane.xlu0 %220
        %v222 = vadd.f32 %v219, %v221
        %vm223 = vcmask 7168
        %224 = vst.msk [vmem:[#allocation3] sm:$0xff] %vm223, %v222
        %225 = vst.msk [vmem:[#allocation2] sm:$0xff] %vm223, %v206
        %v226 = vld [vmem:[%s187] sm:$0xff]
        %s227 = smul.u32 %s21, 128
        %v228 = vstv %s227
        %v229 = vsub.s32 %v226, %v228
        %230 = vset.pattern.permute.xlu0 0
        %231 = vperm.xlu0 %230, %v229
        %v232 = vpop.permute.xlu0 %231
        %vm233 = vcmp.eq.s32.totalorder %v202, %v232
        %v234 = vsel %vm233, 0.9, 0.0
        %v235 = vadd.f32 %v234, 0.000390625
        %v236 = vmul.f32 %v200, %v235
        %v237 = vld [vmem:[#allocation4] sm:$0xff]
        %238 = vadd.xlane.f32.xlu0 %v236
        %v239 = vpop.xlane.xlu0 %238
        %v240 = vadd.f32 %v237, %v239
        %241 = vst.msk [vmem:[#allocation4] sm:$0xff] %vm223, %v240
        %p242 = scmp.eq.s32.totalorder %s21, 1
        // Predicated region
        $region37: #{tpu_custom_call.1} parent=27 // pred_check
          %p243 = pneg %p242
        $region38: #{tpu_custom_call.1} parent=27 // pred_check_branch
          %245 = sbr.rel (%p243) target = $region40
        $region39: #{tpu_custom_call.1} parent=27 // pred_region
          %v246 = vld [vmem:[#allocation2] sm:$0xff]
          %v247 = vld [vmem:[#allocation3] sm:$0xff]
          %v248 = vlog2.pop %v247
          %v249 = vmul.f32 %v248, 0.6931472
          %v250 = vadd.f32 %v246, %v249
          %v251 = vld [vmem:[#allocation4] sm:$0xff]
          %v252 = vsub.f32 %v250, %v251
          %253 = vst.msk [vmem:[%s191] sm:$0xff] %vm223, %v252
        $region40: #{tpu_custom_call.1} parent=27 // pred_fallthru
          _
        %p254 = scmp.lt.s32.totalorder %s20, 1
        %s255 = scalar_select %p254, %s20, 1
        %s256 = smul.addr %s255, 8
        %s257 = scalar_lea.vmem %s2, %s256
        // Predicated region
        $region41: #{tpu_custom_call.1} parent=27 // pred_check
          %p258 = pneg %p100
        $region42: #{tpu_custom_call.1} parent=27 // pred_check_branch
          %260 = sbr.rel (%p258) target = $region44
        $region43: #{tpu_custom_call.1} parent=27 // pred_region
          _
        $region44: #{tpu_custom_call.1} parent=27 // pred_fallthru
          _
      $region28: #{tpu_custom_call.1} parent=5 // pred_fallthru
        _
      %p261 = scmp.le.s32.totalorder 2, %s11
      // Predicated region
      $region45: #{tpu_custom_call.1} parent=5 // pred_check
        %p262 = pneg %p261
      $region46: #{tpu_custom_call.1} parent=5 // pred_check_branch
        %264 = sbr.rel (%p262) target = $region48
      $region47: #{tpu_custom_call.1} parent=5 // pred_region
        %s265 = ssub.s32 %s11, 2
        // Predicated region
        $region49: #{tpu_custom_call.1} parent=47 // pred_check
          %p266 = pneg %p106
        $region50: #{tpu_custom_call.1} parent=47 // pred_check_branch
          %268 = sbr.rel (%p266) target = $region52
        $region51: #{tpu_custom_call.1} parent=47 // pred_region
          %p269 = scmp.lt.s32.totalorder %s22, 1
          %s270 = scalar_select %p269, %s22, 1
          %s271 = smul.addr %s270, 8
          %s272 = scalar_lea.vmem %s2, %s271
        $region52: #{tpu_custom_call.1} parent=47 // pred_fallthru
          _
      $region48: #{tpu_custom_call.1} parent=5 // pred_fallthru
        _
    $region6: #{tpu_custom_call.1} parent=1 // loop_footer
      %s15 = sadd.s32 1, %s11
    $region7: #{tpu_custom_call.1} parent=1 // loop_footer_branch
      %10 = sbr.rel target = $region3
    $region8: #{tpu_custom_call.1} parent=1 // loop_exit
      _
    %273 = vsyncpa [#allocation6], 1
    %s274 = scalar_lea.sflag [#allocation6], 1
    %275 = vsyncpa %s274, 1

</llo_original>
